<compile_context>
chip_gen: v7x
topology: tpu7x:2x2x1
jax: 0.10.0
libtpu: 0.0.40
codegen_flags: <defaults>
</compile_context>

<pallas_src>
import functools

import jax
import jax.numpy as jnp
from jax.experimental import pallas as pl
from jax.experimental.pallas import tpu as pltpu

IN_DIM = 784
H1_DIM = 128
H2_DIM = 64
H2_PAD = 128            # fc2 output lane-padded to a full vreg width
OUT_DIM = 10
OUT_PAD = 128           # lane-dense padded output width
NEG_BIG = -1e30         # padded fc3 logits -> softmax prob exactly 0 (f32)
NEG_GATE = -1e4         # padded fc2 pre-activation -> sigmoid exactly 0


def _round_up(v, m):
    return ((v + m - 1) // m) * m


def mlp_kernel(x_ref, w1_ref, b1_ref, w2_ref, b2_ref, w3_ref, b3_ref, out_ref):
    # x tile arrives as f32; cast to bf16 in-kernel (cheap VPU op, hidden
    # under the MXU) so HBM only carries the f32 bytes once.
    x = x_ref[...].astype(jnp.bfloat16)                           # (bm, 784)

    # fc1 + sigmoid (MXU bf16, f32 accumulate; sigmoid via a single EUP tanh)
    z1 = jnp.dot(x, w1_ref[...], preferred_element_type=jnp.float32) + b1_ref[...]
    h1 = 0.5 * jnp.tanh(0.5 * z1) + 0.5                           # (bm, 128) f32

    # fc2 + sigmoid; columns 64:128 are padding (zero weights, -1e4 bias),
    # so h2[:, 64:] == 0 exactly.
    z2 = jnp.dot(h1.astype(jnp.bfloat16), w2_ref[...],
                 preferred_element_type=jnp.float32) + b2_ref[...]
    h2 = 0.5 * jnp.tanh(0.5 * z2) + 0.5                           # (bm, 128) f32

    # fc3 (padded to 128 lanes) + softmax over the last axis.  Padded columns
    # have zero weights and a -1e30 bias (kept in f32) -> exp underflows to 0.
    z3 = jnp.dot(h2.astype(jnp.bfloat16), w3_ref[...],
                 preferred_element_type=jnp.float32) + b3_ref[...]
    z3 = z3 - jnp.max(z3, axis=1, keepdims=True)
    e = jnp.exp(z3)
    inv_sum = pl.reciprocal(jnp.sum(e, axis=1, keepdims=True), approx=True)
    out_ref[...] = (e * inv_sum).astype(out_ref.dtype)            # (bm, 128) bf16


def prepare_params(params):
    """One-time prep: transpose to (in, out), cast MXU inputs to bf16, pad."""
    w1t = jnp.asarray(params["w1"]).T.astype(jnp.bfloat16)                 # (784, 128)
    b1 = jnp.asarray(params["b1"]).reshape(1, H1_DIM).astype(jnp.float32)

    w2t = jnp.zeros((H1_DIM, H2_PAD), jnp.float32)
    w2t = w2t.at[:, :H2_DIM].set(jnp.asarray(params["w2"]).T).astype(jnp.bfloat16)
    b2 = jnp.full((1, H2_PAD), NEG_GATE, jnp.float32)
    b2 = b2.at[0, :H2_DIM].set(jnp.asarray(params["b2"]).astype(jnp.float32))

    w3t = jnp.zeros((H2_PAD, OUT_PAD), jnp.float32)
    w3t = w3t.at[:H2_DIM, :OUT_DIM].set(jnp.asarray(params["w3"]).T).astype(jnp.bfloat16)
    b3 = jnp.full((1, OUT_PAD), NEG_BIG, jnp.float32)
    b3 = b3.at[0, :OUT_DIM].set(jnp.asarray(params["b3"]).astype(jnp.float32))

    return {"w1t": w1t, "b1": b1, "w2t": w2t, "b2": b2, "w3t": w3t, "b3": b3}


@functools.partial(jax.jit, static_argnames=("block_m",))
def network_forward(x, prep, *, block_m=1024):
    """x: (N, 784) float32.  prep: output of prepare_params()."""
    n = x.shape[0]
    x = x.astype(jnp.float32)

    # Batch tile: multiple of 8 (f32 sublane), capped at block_m, and >=2 grid
    # steps whenever the batch allows so v7x megacore can shard the grid.
    if n <= 8:
        bm = n
    else:
        bm = min(block_m, _round_up(pl.cdiv(_round_up(n, 8), 2), 8))
    grid = (pl.cdiv(n, bm),)     # partial last block handled by Pallas masking

    const = lambda shape: pl.BlockSpec(shape, lambda i: (0, 0))

    out_padded = pl.pallas_call(
        mlp_kernel,
        out_shape=jax.ShapeDtypeStruct((n, OUT_PAD), jnp.bfloat16),
        grid=grid,
        in_specs=[
            pl.BlockSpec((bm, IN_DIM), lambda i: (i, 0)),        # x tile (streamed, f32)
            const((IN_DIM, H1_DIM)), const((1, H1_DIM)),         # fc1 (VMEM-resident)
            const((H1_DIM, H2_PAD)), const((1, H2_PAD)),         # fc2 (lane-padded)
            const((H2_PAD, OUT_PAD)), const((1, OUT_PAD)),       # fc3 (lane-padded)
        ],
        out_specs=pl.BlockSpec((bm, OUT_PAD), lambda i: (i, 0)),
        compiler_params=pltpu.CompilerParams(
            dimension_semantics=("parallel",),
            vmem_limit_bytes=32 * 1024 * 1024),
    )(x, prep["w1t"], prep["b1"], prep["w2t"], prep["b2"], prep["w3t"], prep["b3"])

    return out_padded[:, :OUT_DIM].astype(jnp.float32)


def init_params(key):
    """Deterministic init matching the nn.Linear shapes (Kaiming-uniform-ish)."""
    ks = jax.random.split(key, 6)

    def linear(kw, kb, fan_in, fan_out):
        bound = 1.0 / jnp.sqrt(fan_in)
        w = jax.random.uniform(kw, (fan_out, fan_in), jnp.float32, -bound, bound)
        b = jax.random.uniform(kb, (fan_out,), jnp.float32, -bound, bound)
        return w, b

    w1, b1 = linear(ks[0], ks[1], IN_DIM, H1_DIM)
    w2, b2 = linear(ks[2], ks[3], H1_DIM, H2_DIM)
    w3, b3 = linear(ks[4], ks[5], H2_DIM, OUT_DIM)
    return {"w1": w1, "b1": b1, "w2": w2, "b2": b2, "w3": w3, "b3": b3}


def reference_forward(x, p):
    h1 = jax.nn.sigmoid(x @ p["w1"].T + p["b1"])
    h2 = jax.nn.sigmoid(h1 @ p["w2"].T + p["b2"])
    return jax.nn.softmax(h2 @ p["w3"].T + p["b3"], axis=1)


if __name__ == "__main__":
    key = jax.random.PRNGKey(0)
    kx, kp = jax.random.split(key)
    params = init_params(kp)
    prep = prepare_params(params)          # one-time weight prep, outside jit

    # Small shape consistent with the module (single tile path).
    batch = 8
    x = jax.random.normal(kx, (batch, IN_DIM), jnp.float32)

    out = jax.block_until_ready(network_forward(x, prep))
    ref = reference_forward(x, params)

    assert out.shape == (batch, OUT_DIM)
    # bf16 matmuls/output + approx reciprocal -> loose but meaningful tolerances
    assert jnp.allclose(jnp.sum(out, axis=1), 1.0, atol=2e-2)
    assert jnp.allclose(out, ref, atol=2e-2, rtol=0), float(jnp.abs(out - ref).max())

    # Exercise the multi-tile grid + partial-last-block (ragged batch) path.
    batch2 = 300
    x2 = jax.random.normal(kx, (batch2, IN_DIM), jnp.float32)
    out2 = jax.block_until_ready(network_forward(x2, prep))
    ref2 = reference_forward(x2, params)
    assert out2.shape == (batch2, OUT_DIM)
    assert jnp.allclose(jnp.sum(out2, axis=1), 1.0, atol=2e-2)
    assert jnp.allclose(out2, ref2, atol=2e-2, rtol=0), float(jnp.abs(out2 - ref2).max())

    print("KERNEL_OK")
</pallas_src>

<mosaic_0001>
module attributes {stable_mosaic.version = 11 : i64} {
  func.func @mlp_kernel(%arg0: i32, %arg1: memref<8x784xf32, #tpu.memory_space<vmem>>, %arg2: memref<784x128xbf16, #tpu.memory_space<vmem>>, %arg3: memref<1x128xf32, #tpu.memory_space<vmem>>, %arg4: memref<128x128xbf16, #tpu.memory_space<vmem>>, %arg5: memref<1x128xf32, #tpu.memory_space<vmem>>, %arg6: memref<128x128xbf16, #tpu.memory_space<vmem>>, %arg7: memref<1x128xf32, #tpu.memory_space<vmem>>, %arg8: memref<8x128xbf16, #tpu.memory_space<vmem>>) attributes {dimension_semantics = [#tpu.dimension_semantics<parallel>], iteration_bounds = array<i64: 1>, scalar_prefetch = 0 : i64, scratch_operands = 0 : i64, tpu.core_type = #tpu.core_type<tc>, window_params = [{transform_indices = @transform_0, window_bounds = array<i64: 8, 784>}, {pipeline_mode = #tpu.pipeline_mode<synchronous>, transform_indices = @transform_1, window_bounds = array<i64: 784, 128>}, {pipeline_mode = #tpu.pipeline_mode<synchronous>, transform_indices = @transform_2, window_bounds = array<i64: 1, 128>}, {pipeline_mode = #tpu.pipeline_mode<synchronous>, transform_indices = @transform_3, window_bounds = array<i64: 128, 128>}, {pipeline_mode = #tpu.pipeline_mode<synchronous>, transform_indices = @transform_4, window_bounds = array<i64: 1, 128>}, {pipeline_mode = #tpu.pipeline_mode<synchronous>, transform_indices = @transform_5, window_bounds = array<i64: 128, 128>}, {pipeline_mode = #tpu.pipeline_mode<synchronous>, transform_indices = @transform_6, window_bounds = array<i64: 1, 128>}, {transform_indices = @transform_7, window_bounds = array<i64: 8, 128>}]} {
    %c0 = arith.constant 0 : index
    %c0_0 = arith.constant 0 : index
    %0 = vector.load %arg1[%c0, %c0_0] : memref<8x784xf32, #tpu.memory_space<vmem>>, vector<8x784xf32>
    %1 = arith.truncf %0 : vector<8x784xf32> to vector<8x784xbf16>
    %c0_1 = arith.constant 0 : index
    %c0_2 = arith.constant 0 : index
    %2 = vector.load %arg2[%c0_1, %c0_2] : memref<784x128xbf16, #tpu.memory_space<vmem>>, vector<784x128xbf16>
    %cst = arith.constant dense<0.000000e+00> : vector<8x128xf32>
    %3 = tpu.matmul %1, %2, %cst {dimension_numbers = #tpu.dot_dimension_numbers<[1], [0], [0], [1], [0, 0, 1, 1], [], []>} : vector<8x784xbf16>, vector<784x128xbf16>, vector<8x128xf32> -> vector<8x128xf32>
    %c0_3 = arith.constant 0 : index
    %c0_4 = arith.constant 0 : index
    %4 = vector.load %arg3[%c0_3, %c0_4] : memref<1x128xf32, #tpu.memory_space<vmem>>, vector<1x128xf32>
    %5 = vector.broadcast %4 : vector<1x128xf32> to vector<8x128xf32>
    %6 = arith.addf %3, %5 : vector<8x128xf32>
    %cst_5 = arith.constant 5.000000e-01 : f32
    %7 = vector.broadcast %cst_5 : f32 to vector<8x128xf32>
    %8 = arith.mulf %7, %6 : vector<8x128xf32>
    %9 = math.tanh %8 : vector<8x128xf32>
    %cst_6 = arith.constant 5.000000e-01 : f32
    %10 = vector.broadcast %cst_6 : f32 to vector<8x128xf32>
    %11 = arith.mulf %10, %9 : vector<8x128xf32>
    %cst_7 = arith.constant 5.000000e-01 : f32
    %12 = vector.broadcast %cst_7 : f32 to vector<8x128xf32>
    %13 = arith.addf %11, %12 : vector<8x128xf32>
    %14 = arith.truncf %13 : vector<8x128xf32> to vector<8x128xbf16>
    %c0_8 = arith.constant 0 : index
    %c0_9 = arith.constant 0 : index
    %15 = vector.load %arg4[%c0_8, %c0_9] : memref<128x128xbf16, #tpu.memory_space<vmem>>, vector<128x128xbf16>
    %cst_10 = arith.constant dense<0.000000e+00> : vector<8x128xf32>
    %16 = tpu.matmul %14, %15, %cst_10 {dimension_numbers = #tpu.dot_dimension_numbers<[1], [0], [0], [1], [0, 0, 1, 1], [], []>} : vector<8x128xbf16>, vector<128x128xbf16>, vector<8x128xf32> -> vector<8x128xf32>
    %c0_11 = arith.constant 0 : index
    %c0_12 = arith.constant 0 : index
    %17 = vector.load %arg5[%c0_11, %c0_12] : memref<1x128xf32, #tpu.memory_space<vmem>>, vector<1x128xf32>
    %18 = vector.broadcast %17 : vector<1x128xf32> to vector<8x128xf32>
    %19 = arith.addf %16, %18 : vector<8x128xf32>
    %cst_13 = arith.constant 5.000000e-01 : f32
    %20 = vector.broadcast %cst_13 : f32 to vector<8x128xf32>
    %21 = arith.mulf %20, %19 : vector<8x128xf32>
    %22 = math.tanh %21 : vector<8x128xf32>
    %cst_14 = arith.constant 5.000000e-01 : f32
    %23 = vector.broadcast %cst_14 : f32 to vector<8x128xf32>
    %24 = arith.mulf %23, %22 : vector<8x128xf32>
    %cst_15 = arith.constant 5.000000e-01 : f32
    %25 = vector.broadcast %cst_15 : f32 to vector<8x128xf32>
    %26 = arith.addf %24, %25 : vector<8x128xf32>
    %27 = arith.truncf %26 : vector<8x128xf32> to vector<8x128xbf16>
    %c0_16 = arith.constant 0 : index
    %c0_17 = arith.constant 0 : index
    %28 = vector.load %arg6[%c0_16, %c0_17] : memref<128x128xbf16, #tpu.memory_space<vmem>>, vector<128x128xbf16>
    %cst_18 = arith.constant dense<0.000000e+00> : vector<8x128xf32>
    %29 = tpu.matmul %27, %28, %cst_18 {dimension_numbers = #tpu.dot_dimension_numbers<[1], [0], [0], [1], [0, 0, 1, 1], [], []>} : vector<8x128xbf16>, vector<128x128xbf16>, vector<8x128xf32> -> vector<8x128xf32>
    %c0_19 = arith.constant 0 : index
    %c0_20 = arith.constant 0 : index
    %30 = vector.load %arg7[%c0_19, %c0_20] : memref<1x128xf32, #tpu.memory_space<vmem>>, vector<1x128xf32>
    %31 = vector.broadcast %30 : vector<1x128xf32> to vector<8x128xf32>
    %32 = arith.addf %29, %31 : vector<8x128xf32>
    %cst_21 = arith.constant dense<0xFF800000> : vector<8xf32>
    %33 = vector.multi_reduction <maximumf>, %32, %cst_21 [1] : vector<8x128xf32> to vector<8xf32>
    %34 = vector.shape_cast %33 : vector<8xf32> to vector<8x1xf32>
    %35 = vector.broadcast %34 : vector<8x1xf32> to vector<8x128xf32>
    %36 = arith.subf %32, %35 : vector<8x128xf32>
    %37 = math.exp %36 : vector<8x128xf32>
    %cst_22 = arith.constant dense<0.000000e+00> : vector<8xf32>
    %38 = vector.multi_reduction <add>, %37, %cst_22 [1] : vector<8x128xf32> to vector<8xf32>
    %39 = vector.shape_cast %38 : vector<8xf32> to vector<8x1xf32>
    %40 = tpu.reciprocal %39 {approx = true} : vector<8x1xf32> -> vector<8x1xf32>
    %41 = vector.broadcast %40 : vector<8x1xf32> to vector<8x128xf32>
    %42 = arith.mulf %37, %41 : vector<8x128xf32>
    %43 = arith.truncf %42 : vector<8x128xf32> to vector<8x128xbf16>
    %c0_23 = arith.constant 0 : index
    %c0_24 = arith.constant 0 : index
    %44 = vector.load %arg8[%c0_23, %c0_24] : memref<8x128xbf16, #tpu.memory_space<vmem>>, vector<8x128xbf16>
    tpu.vector_store %arg8[%c0_23, %c0_24], %43 {strides = array<i32>} : memref<8x128xbf16, #tpu.memory_space<vmem>>, vector<8x128xbf16>,
    return
  }
  func.func @transform_0(%arg0: i32) -> (i32, i32) {
    %c0_i32 = arith.constant 0 : i32
    %c0_i32_0 = arith.constant 0 : i32
    return %arg0, %c0_i32 : i32, i32
  }
  func.func @transform_1(%arg0: i32) -> (i32, i32) {
    %c0_i32 = arith.constant 0 : i32
    %c0_i32_0 = arith.constant 0 : i32
    %c0_i32_1 = arith.constant 0 : i32
    return %c0_i32, %c0_i32_0 : i32, i32
  }
  func.func @transform_2(%arg0: i32) -> (i32, i32) {
    %c0_i32 = arith.constant 0 : i32
    %c0_i32_0 = arith.constant 0 : i32
    %c0_i32_1 = arith.constant 0 : i32
    return %c0_i32, %c0_i32_0 : i32, i32
  }
  func.func @transform_3(%arg0: i32) -> (i32, i32) {
    %c0_i32 = arith.constant 0 : i32
    %c0_i32_0 = arith.constant 0 : i32
    %c0_i32_1 = arith.constant 0 : i32
    return %c0_i32, %c0_i32_0 : i32, i32
  }
  func.func @transform_4(%arg0: i32) -> (i32, i32) {
    %c0_i32 = arith.constant 0 : i32
    %c0_i32_0 = arith.constant 0 : i32
    %c0_i32_1 = arith.constant 0 : i32
    return %c0_i32, %c0_i32_0 : i32, i32
  }
  func.func @transform_5(%arg0: i32) -> (i32, i32) {
    %c0_i32 = arith.constant 0 : i32
    %c0_i32_0 = arith.constant 0 : i32
    %c0_i32_1 = arith.constant 0 : i32
    return %c0_i32, %c0_i32_0 : i32, i32
  }
  func.func @transform_6(%arg0: i32) -> (i32, i32) {
    %c0_i32 = arith.constant 0 : i32
    %c0_i32_0 = arith.constant 0 : i32
    %c0_i32_1 = arith.constant 0 : i32
    return %c0_i32, %c0_i32_0 : i32, i32
  }
  func.func @transform_7(%arg0: i32) -> (i32, i32) {
    %c0_i32 = arith.constant 0 : i32
    %c0_i32_0 = arith.constant 0 : i32
    return %arg0, %c0_i32 : i32, i32
  }
}

</mosaic_0001>

<llo_original>
// kernel: network_forward.1
$region0: #{network_forward.1}
  #allocation0 [shape = 'u32[]', space=smem, size = 0x4, offset = 0x4, fixed_abs, tag = 'smem constant byte address 0x4 - core index']
  #allocation1 [shape = 'u32[144,128]{1,0:T(1,128)}', space=vmem, size = 0x12000, scoped, tag = 'internal scratch']
  %s0 = inlined_call_operand.hbm [shape: f32[8,784], index: 0, kind: input, shape index: {}]
  %s1 = inlined_call_operand.hbm [shape: bf16[784,128], index: 1, kind: input, shape index: {}]
  %s2 = inlined_call_operand.vmem [shape: f32[1,128], index: 2, kind: input, shape index: {}]
  %s3 = inlined_call_operand.hbm [shape: bf16[128,128], index: 3, kind: input, shape index: {}]
  %s4 = inlined_call_operand.vmem [shape: f32[1,128], index: 4, kind: input, shape index: {}]
  %s5 = inlined_call_operand.hbm [shape: bf16[128,128], index: 5, kind: input, shape index: {}]
  %s6 = inlined_call_operand.vmem [shape: f32[1,128], index: 6, kind: input, shape index: {}]
  %s7 = inlined_call_operand.vmem [shape: bf16[8,128], index: 7, kind: output, shape index: {}]
  %s8 = sld [smem:[#allocation0]]
  $region54: #{network_forward.1} parent=0
    _
  %s10 = ssub.s32 1, %s8
  %s11 = scalar_select 0, %s10, %s8
  $region1: #{network_forward.1} parent=0
    #allocation2 [shape = 'u8[28672]{0}', space=vmem, size = 0x7000, scoped, tag = 'input window, operand 0, single buffered']
    #allocation3 [shape = 's32[1]{0}', space=sflag, size = 0x4, scoped, tag = 'scoped memory for network_forward.1']
    #allocation4 [shape = 'u8[200704]{0}', space=vmem, size = 0x31000, scoped, tag = 'input window, operand 1, single buffered']
    #allocation5 [shape = 's32[1]{0}', space=sflag, size = 0x4, scoped, tag = 'scoped memory for network_forward.1']
    #allocation6 [shape = 'u8[32768]{0}', space=vmem, size = 0x8000, scoped, tag = 'input window, operand 3, single buffered']
    #allocation7 [shape = 'u8[32768]{0}', space=vmem, size = 0x8000, scoped, tag = 'input window, operand 5, single buffered']
    #allocation8 [shape = 's32[1]{0}', space=sflag, size = 0x4, scoped, tag = 'scoped memory for network_forward.1']
    %12 = vsyncpa [#allocation3], 0
    %13 = vsyncpa [#allocation5], 0
    %14 = vsyncpa [#allocation8], 0
    // Predicated region
    $region2: #{network_forward.1} parent=1 // pred_check
      _
    $region3: #{network_forward.1} parent=1 // pred_check_branch
      %16 = sbr.rel (0) target = $region5
    $region4: #{network_forward.1} parent=1 // pred_region
      %s18 = ssub.s32 896, 896
      %19 = vsyncadd [#allocation3], %s18
      %s21 = sshll.u32 [#allocation2], 4
      %s22 = int_to_ptr.vmem [resolvable:$true] %s21
      %24 = dma.hbm_to_vmem [thread:$0]  %s0, 896, %s22, [#allocation3]
    $region5: #{network_forward.1} parent=1 // pred_fallthru
      _
    // Predicated region
    $region6: #{network_forward.1} parent=1 // pred_check
      _
    $region7: #{network_forward.1} parent=1 // pred_check_branch
      %26 = sbr.rel (0) target = $region9
    $region8: #{network_forward.1} parent=1 // pred_region
      %s28 = ssub.s32 6272, 6272
      %29 = vsyncadd [#allocation5], %s28
      %s30 = sshll.u32 [#allocation4], 4
      %s31 = int_to_ptr.vmem [resolvable:$true] %s30
      %36 = dma.hbm_to_vmem [thread:$0]  %s1, 6272, %s31, [#allocation5], 64, 64, 4
    $region9: #{network_forward.1} parent=1 // pred_fallthru
      _
    // Predicated region
    $region10: #{network_forward.1} parent=1 // pred_check
      _
    $region11: #{network_forward.1} parent=1 // pred_check_branch
      %38 = sbr.rel (0) target = $region13
    $region12: #{network_forward.1} parent=1 // pred_region
      _
    $region13: #{network_forward.1} parent=1 // pred_fallthru
      _
    // Predicated region
    $region14: #{network_forward.1} parent=1 // pred_check
      _
    $region15: #{network_forward.1} parent=1 // pred_check_branch
      %40 = sbr.rel (0) target = $region17
    $region16: #{network_forward.1} parent=1 // pred_region
      %s42 = ssub.s32 1024, 1024
      %43 = vsyncadd [#allocation5], %s42
      %s44 = sshll.u32 [#allocation6], 4
      %s45 = int_to_ptr.vmem [resolvable:$true] %s44
      %50 = dma.hbm_to_vmem [thread:$0]  %s3, 1024, %s45, [#allocation5], 64, 64, 4
    $region17: #{network_forward.1} parent=1 // pred_fallthru
      _
    // Predicated region
    $region18: #{network_forward.1} parent=1 // pred_check
      _
    $region19: #{network_forward.1} parent=1 // pred_check_branch
      %52 = sbr.rel (0) target = $region21
    $region20: #{network_forward.1} parent=1 // pred_region
      _
    $region21: #{network_forward.1} parent=1 // pred_fallthru
      _
    // Predicated region
    $region22: #{network_forward.1} parent=1 // pred_check
      _
    $region23: #{network_forward.1} parent=1 // pred_check_branch
      %54 = sbr.rel (0) target = $region25
    $region24: #{network_forward.1} parent=1 // pred_region
      %s56 = ssub.s32 1024, 1024
      %57 = vsyncadd [#allocation8], %s56
      %s58 = sshll.u32 [#allocation7], 4
      %s59 = int_to_ptr.vmem [resolvable:$true] %s58
      %64 = dma.hbm_to_vmem [thread:$0]  %s5, 1024, %s59, [#allocation8], 64, 64, 4
    $region25: #{network_forward.1} parent=1 // pred_fallthru
      _
    // Predicated region
    $region26: #{network_forward.1} parent=1 // pred_check
      _
    $region27: #{network_forward.1} parent=1 // pred_check_branch
      %66 = sbr.rel (0) target = $region29
    $region28: #{network_forward.1} parent=1 // pred_region
      _
    $region29: #{network_forward.1} parent=1 // pred_fallthru
      _
    // Predicated region
    $region30: #{network_forward.1} parent=1 // pred_check
      _
    $region31: #{network_forward.1} parent=1 // pred_check_branch
      %68 = sbr.rel (0) target = $region33
    $region32: #{network_forward.1} parent=1 // pred_region
      %69 = dma.done [#allocation3], 896
    $region33: #{network_forward.1} parent=1 // pred_fallthru
      _
    // Predicated region
    $region34: #{network_forward.1} parent=1 // pred_check
      _
    $region35: #{network_forward.1} parent=1 // pred_check_branch
      %71 = sbr.rel (0) target = $region37
    $region36: #{network_forward.1} parent=1 // pred_region
      %72 = dma.done [#allocation5], 6272
    $region37: #{network_forward.1} parent=1 // pred_fallthru
      _
    // Predicated region
    $region38: #{network_forward.1} parent=1 // pred_check
      _
    $region39: #{network_forward.1} parent=1 // pred_check_branch
      %74 = sbr.rel (0) target = $region41
    $region40: #{network_forward.1} parent=1 // pred_region
      %75 = dma.done [#allocation5], 1024
    $region41: #{network_forward.1} parent=1 // pred_fallthru
      _
    // Predicated region
    $region42: #{network_forward.1} parent=1 // pred_check
      _
    $region43: #{network_forward.1} parent=1 // pred_check_branch
      %77 = sbr.rel (0) target = $region45
    $region44: #{network_forward.1} parent=1 // pred_region
      %78 = dma.done [#allocation8], 1024
    $region45: #{network_forward.1} parent=1 // pred_fallthru
      _
    %v80 = vld [vmem:[#allocation2] sm:$0xff]
    %v81 = vld [vmem:[#allocation2 + $0x8] sm:$0xff]
    %v82 = vld [vmem:[#allocation2 + $0x10] sm:$0xff]
    %v83 = vld [vmem:[#allocation2 + $0x18] sm:$0xff]
    %v84 = vld [vmem:[#allocation2 + $0x20] sm:$0xff]
    %v85 = vld [vmem:[#allocation2 + $0x28] sm:$0xff]
    %v86 = vld [vmem:[#allocation2 + $0x30] sm:$0xff]
    %v87 = vpack.c.bf16 %v80, %v80
    %v88 = vpack.c.bf16 %v81, %v81
    %v89 = vpack.c.bf16 %v82, %v82
    %v90 = vpack.c.bf16 %v83, %v83
    %v91 = vpack.c.bf16 %v84, %v84
    %v92 = vpack.c.bf16 %v85, %v85
    %v93 = vpack.c.bf16 %v86, %v86
    %v94 = vld [vmem:[#allocation4] sm:$0xf]
    %v95 = vld [vmem:[#allocation4 + $0x4] sm:$0xf]
    %v96 = vld [vmem:[#allocation4 + $0x8] sm:$0xf]
    %v97 = vld [vmem:[#allocation4 + $0xc] sm:$0xf]
    %v98 = vld [vmem:[#allocation4 + $0x10] sm:$0xf]
    %v99 = vld [vmem:[#allocation4 + $0x14] sm:$0xf]
    %v100 = vld [vmem:[#allocation4 + $0x18] sm:$0xf]
    %v101 = vld [vmem:[#allocation4 + $0x1c] sm:$0xf]
    %v102 = vld [vmem:[#allocation4 + $0x20] sm:$0xf]
    %v103 = vld [vmem:[#allocation4 + $0x24] sm:$0xf]
    %v104 = vld [vmem:[#allocation4 + $0x28] sm:$0xf]
    %v105 = vld [vmem:[#allocation4 + $0x2c] sm:$0xf]
    %v106 = vld [vmem:[#allocation4 + $0x30] sm:$0xf]
    %v107 = vld [vmem:[#allocation4 + $0x34] sm:$0xf]
    %v108 = vld [vmem:[#allocation4 + $0x38] sm:$0xf]
    %v109 = vld [vmem:[#allocation4 + $0x3c] sm:$0xf]
    %v110 = vld [vmem:[#allocation4 + $0x40] sm:$0xf]
    %v111 = vld [vmem:[#allocation4 + $0x44] sm:$0xf]
    %v112 = vld [vmem:[#allocation4 + $0x48] sm:$0xf]
    %v113 = vld [vmem:[#allocation4 + $0x4c] sm:$0xf]
    %v114 = vld [vmem:[#allocation4 + $0x50] sm:$0xf]
    %v115 = vld [vmem:[#allocation4 + $0x54] sm:$0xf]
    %v116 = vld [vmem:[#allocation4 + $0x58] sm:$0xf]
    %v117 = vld [vmem:[#allocation4 + $0x5c] sm:$0xf]
    %v118 = vld [vmem:[#allocation4 + $0x60] sm:$0xf]
    %v119 = vld [vmem:[#allocation4 + $0x64] sm:$0xf]
    %v120 = vld [vmem:[#allocation4 + $0x68] sm:$0xf]
    %v121 = vld [vmem:[#allocation4 + $0x6c] sm:$0xf]
    %v122 = vld [vmem:[#allocation4 + $0x70] sm:$0xf]
    %v123 = vld [vmem:[#allocation4 + $0x74] sm:$0xf]
    %v124 = vld [vmem:[#allocation4 + $0x78] sm:$0xf]
    %v125 = vld [vmem:[#allocation4 + $0x7c] sm:$0xf]
    %v126 = vld [vmem:[#allocation4 + $0x80] sm:$0xf]
    %v127 = vld [vmem:[#allocation4 + $0x84] sm:$0xf]
    %v128 = vld [vmem:[#allocation4 + $0x88] sm:$0xf]
    %v129 = vld [vmem:[#allocation4 + $0x8c] sm:$0xf]
    %v130 = vld [vmem:[#allocation4 + $0x90] sm:$0xf]
    %v131 = vld [vmem:[#allocation4 + $0x94] sm:$0xf]
    %v132 = vld [vmem:[#allocation4 + $0x98] sm:$0xf]
    %v133 = vld [vmem:[#allocation4 + $0x9c] sm:$0xf]
    %v134 = vld [vmem:[#allocation4 + $0xa0] sm:$0xf]
    %v135 = vld [vmem:[#allocation4 + $0xa4] sm:$0xf]
    %v136 = vld [vmem:[#allocation4 + $0xa8] sm:$0xf]
    %v137 = vld [vmem:[#allocation4 + $0xac] sm:$0xf]
    %v138 = vld [vmem:[#allocation4 + $0xb0] sm:$0xf]
    %v139 = vld [vmem:[#allocation4 + $0xb4] sm:$0xf]
    %v140 = vld [vmem:[#allocation4 + $0xb8] sm:$0xf]
    %v141 = vld [vmem:[#allocation4 + $0xbc] sm:$0xf]
    %v142 = vld [vmem:[#allocation4 + $0xc0] sm:$0xf]
    %v143 = vld [vmem:[#allocation4 + $0xc4] sm:$0xf]
    %v144 = vld [vmem:[#allocation4 + $0xc8] sm:$0xf]
    %v145 = vld [vmem:[#allocation4 + $0xcc] sm:$0xf]
    %v146 = vld [vmem:[#allocation4 + $0xd0] sm:$0xf]
    %v147 = vld [vmem:[#allocation4 + $0xd4] sm:$0xf]
    %v148 = vld [vmem:[#allocation4 + $0xd8] sm:$0xf]
    %v149 = vld [vmem:[#allocation4 + $0xdc] sm:$0xf]
    %v150 = vld [vmem:[#allocation4 + $0xe0] sm:$0xf]
    %v151 = vld [vmem:[#allocation4 + $0xe4] sm:$0xf]
    %v152 = vld [vmem:[#allocation4 + $0xe8] sm:$0xf]
    %v153 = vld [vmem:[#allocation4 + $0xec] sm:$0xf]
    %v154 = vld [vmem:[#allocation4 + $0xf0] sm:$0xf]
    %v155 = vld [vmem:[#allocation4 + $0xf4] sm:$0xf]
    %v156 = vld [vmem:[#allocation4 + $0xf8] sm:$0xf]
    %v157 = vld [vmem:[#allocation4 + $0xfc] sm:$0xf]
    %v158 = vld [vmem:[#allocation4 + $0x100] sm:$0xf]
    %v159 = vld [vmem:[#allocation4 + $0x104] sm:$0xf]
    %v160 = vld [vmem:[#allocation4 + $0x108] sm:$0xf]
    %v161 = vld [vmem:[#allocation4 + $0x10c] sm:$0xf]
    %v162 = vld [vmem:[#allocation4 + $0x110] sm:$0xf]
    %v163 = vld [vmem:[#allocation4 + $0x114] sm:$0xf]
    %v164 = vld [vmem:[#allocation4 + $0x118] sm:$0xf]
    %v165 = vld [vmem:[#allocation4 + $0x11c] sm:$0xf]
    %v166 = vld [vmem:[#allocation4 + $0x120] sm:$0xf]
    %v167 = vld [vmem:[#allocation4 + $0x124] sm:$0xf]
    %v168 = vld [vmem:[#allocation4 + $0x128] sm:$0xf]
    %v169 = vld [vmem:[#allocation4 + $0x12c] sm:$0xf]
    %v170 = vld [vmem:[#allocation4 + $0x130] sm:$0xf]
    %v171 = vld [vmem:[#allocation4 + $0x134] sm:$0xf]
    %v172 = vld [vmem:[#allocation4 + $0x138] sm:$0xf]
    %v173 = vld [vmem:[#allocation4 + $0x13c] sm:$0xf]
    %v174 = vld [vmem:[#allocation4 + $0x140] sm:$0xf]
    %v175 = vld [vmem:[#allocation4 + $0x144] sm:$0xf]
    %v176 = vld [vmem:[#allocation4 + $0x148] sm:$0xf]
    %v177 = vld [vmem:[#allocation4 + $0x14c] sm:$0xf]
    %v178 = vld [vmem:[#allocation4 + $0x150] sm:$0xf]
    %v179 = vld [vmem:[#allocation4 + $0x154] sm:$0xf]
    %v180 = vld [vmem:[#allocation4 + $0x158] sm:$0xf]
    %v181 = vld [vmem:[#allocation4 + $0x15c] sm:$0xf]
    %v182 = vld [vmem:[#allocation4 + $0x160] sm:$0xf]
    %v183 = vld [vmem:[#allocation4 + $0x164] sm:$0xf]
    %v184 = vld [vmem:[#allocation4 + $0x168] sm:$0xf]
    %v185 = vld [vmem:[#allocation4 + $0x16c] sm:$0xf]
    %v186 = vld [vmem:[#allocation4 + $0x170] sm:$0xf]
    %v187 = vld [vmem:[#allocation4 + $0x174] sm:$0xf]
    %v188 = vld [vmem:[#allocation4 + $0x178] sm:$0xf]
    %v189 = vld [vmem:[#allocation4 + $0x17c] sm:$0xf]
    %v190 = vld [vmem:[#allocation4 + $0x180] sm:$0xf]
    %v191 = vld [vmem:[#allocation4 + $0x184] sm:$0xf]
    %v192 = vld [vmem:[%s2] sm:$0x1]
    %v194 = vlaneseq
    %v195 = vshrl.u32 %v194, 7
    %v196 = vsub.s32 0, %v195
    %v197 = vrot.slane %v192, %v196
    %v297 = vunpack.c.l.b16 %v94
    %v298 = vunpack.c.l.b16 %v95
    %v299 = vunpack.c.l.b16 %v96
    %v300 = vunpack.c.l.b16 %v97
    %v301 = vunpack.c.l.b16 %v98
    %v302 = vunpack.c.l.b16 %v99
    %v303 = vunpack.c.l.b16 %v100
    %v304 = vunpack.c.l.b16 %v101
    %v305 = vunpack.c.l.b16 %v102
    %v306 = vunpack.c.l.b16 %v103
    %v307 = vunpack.c.l.b16 %v104
    %v308 = vunpack.c.l.b16 %v105
    %v309 = vunpack.c.l.b16 %v106
    %v310 = vunpack.c.l.b16 %v107
    %v311 = vunpack.c.l.b16 %v108
    %v312 = vunpack.c.l.b16 %v109
    %v313 = vunpack.c.l.b16 %v110
    %v314 = vunpack.c.l.b16 %v111
    %v315 = vunpack.c.l.b16 %v112
    %v316 = vunpack.c.l.b16 %v113
    %v317 = vunpack.c.l.b16 %v114
    %v318 = vunpack.c.l.b16 %v115
    %v319 = vunpack.c.l.b16 %v116
    %v320 = vunpack.c.l.b16 %v117
    %v321 = vunpack.c.l.b16 %v118
    %v322 = vunpack.c.l.b16 %v119
    %v323 = vunpack.c.l.b16 %v120
    %v324 = vunpack.c.l.b16 %v121
    %v325 = vunpack.c.l.b16 %v122
    %v326 = vunpack.c.l.b16 %v123
    %v327 = vunpack.c.l.b16 %v124
    %v328 = vunpack.c.l.b16 %v125
    %v329 = vunpack.c.l.b16 %v126
    %v330 = vunpack.c.l.b16 %v127
    %v331 = vunpack.c.l.b16 %v128
    %v332 = vunpack.c.l.b16 %v129
    %v333 = vunpack.c.l.b16 %v130
    %v334 = vunpack.c.l.b16 %v131
    %v335 = vunpack.c.l.b16 %v132
    %v336 = vunpack.c.l.b16 %v133
    %v337 = vunpack.c.l.b16 %v134
    %v338 = vunpack.c.l.b16 %v135
    %v339 = vunpack.c.l.b16 %v136
    %v340 = vunpack.c.l.b16 %v137
    %v341 = vunpack.c.l.b16 %v138
    %v342 = vunpack.c.l.b16 %v139
    %v343 = vunpack.c.l.b16 %v140
    %v344 = vunpack.c.l.b16 %v141
    %v345 = vunpack.c.l.b16 %v142
    %v346 = vunpack.c.l.b16 %v143
    %v347 = vunpack.c.l.b16 %v144
    %v348 = vunpack.c.l.b16 %v145
    %v349 = vunpack.c.l.b16 %v146
    %v350 = vunpack.c.l.b16 %v147
    %v351 = vunpack.c.l.b16 %v148
    %v352 = vunpack.c.l.b16 %v149
    %v353 = vunpack.c.l.b16 %v150
    %v354 = vunpack.c.l.b16 %v151
    %v355 = vunpack.c.l.b16 %v152
    %v356 = vunpack.c.l.b16 %v153
    %v357 = vunpack.c.l.b16 %v154
    %v358 = vunpack.c.l.b16 %v155
    %v359 = vunpack.c.l.b16 %v156
    %v360 = vunpack.c.l.b16 %v157
    %v361 = vunpack.c.l.b16 %v158
    %v362 = vunpack.c.l.b16 %v159
    %v363 = vunpack.c.l.b16 %v160
    %v364 = vunpack.c.l.b16 %v161
    %v365 = vunpack.c.l.b16 %v162
    %v366 = vunpack.c.l.b16 %v163
    %v367 = vunpack.c.l.b16 %v164
    %v368 = vunpack.c.l.b16 %v165
    %v369 = vunpack.c.l.b16 %v166
    %v370 = vunpack.c.l.b16 %v167
    %v371 = vunpack.c.l.b16 %v168
    %v372 = vunpack.c.l.b16 %v169
    %v373 = vunpack.c.l.b16 %v170
    %v374 = vunpack.c.l.b16 %v171
    %v375 = vunpack.c.l.b16 %v172
    %v376 = vunpack.c.l.b16 %v173
    %v377 = vunpack.c.l.b16 %v174
    %v378 = vunpack.c.l.b16 %v175
    %v379 = vunpack.c.l.b16 %v176
    %v380 = vunpack.c.l.b16 %v177
    %v381 = vunpack.c.l.b16 %v178
    %v382 = vunpack.c.l.b16 %v179
    %v383 = vunpack.c.l.b16 %v180
    %v384 = vunpack.c.l.b16 %v181
    %v385 = vunpack.c.l.b16 %v182
    %v386 = vunpack.c.l.b16 %v183
    %v387 = vunpack.c.l.b16 %v184
    %v388 = vunpack.c.l.b16 %v185
    %v389 = vunpack.c.l.b16 %v186
    %v390 = vunpack.c.l.b16 %v187
    %v391 = vunpack.c.l.b16 %v188
    %v392 = vunpack.c.l.b16 %v189
    %v393 = vunpack.c.l.b16 %v190
    %v394 = vunpack.c.l.b16 %v191
    %v395 = vpack.c.b16 %v298, %v297
    %v396 = vpack.c.b16 %v300, %v299
    %v397 = vpack.c.b16 %v302, %v301
    %v398 = vpack.c.b16 %v304, %v303
    %v399 = vpack.c.b16 %v306, %v305
    %v400 = vpack.c.b16 %v308, %v307
    %v401 = vpack.c.b16 %v310, %v309
    %v402 = vpack.c.b16 %v312, %v311
    %v403 = vpack.c.b16 %v314, %v313
    %v404 = vpack.c.b16 %v316, %v315
    %v405 = vpack.c.b16 %v318, %v317
    %v406 = vpack.c.b16 %v320, %v319
    %v407 = vpack.c.b16 %v322, %v321
    %v408 = vpack.c.b16 %v324, %v323
    %v409 = vpack.c.b16 %v326, %v325
    %v410 = vpack.c.b16 %v328, %v327
    %v411 = vpack.c.b16 %v330, %v329
    %v412 = vpack.c.b16 %v332, %v331
    %v413 = vpack.c.b16 %v334, %v333
    %v414 = vpack.c.b16 %v336, %v335
    %v415 = vpack.c.b16 %v338, %v337
    %v416 = vpack.c.b16 %v340, %v339
    %v417 = vpack.c.b16 %v342, %v341
    %v418 = vpack.c.b16 %v344, %v343
    %v419 = vpack.c.b16 %v346, %v345
    %v420 = vpack.c.b16 %v348, %v347
    %v421 = vpack.c.b16 %v350, %v349
    %v422 = vpack.c.b16 %v352, %v351
    %v423 = vpack.c.b16 %v354, %v353
    %v424 = vpack.c.b16 %v356, %v355
    %v425 = vpack.c.b16 %v358, %v357
    %v426 = vpack.c.b16 %v360, %v359
    %v427 = vpack.c.b16 %v362, %v361
    %v428 = vpack.c.b16 %v364, %v363
    %v429 = vpack.c.b16 %v366, %v365
    %v430 = vpack.c.b16 %v368, %v367
    %v431 = vpack.c.b16 %v370, %v369
    %v432 = vpack.c.b16 %v372, %v371
    %v433 = vpack.c.b16 %v374, %v373
    %v434 = vpack.c.b16 %v376, %v375
    %v435 = vpack.c.b16 %v378, %v377
    %v436 = vpack.c.b16 %v380, %v379
    %v437 = vpack.c.b16 %v382, %v381
    %v438 = vpack.c.b16 %v384, %v383
    %v439 = vpack.c.b16 %v386, %v385
    %v440 = vpack.c.b16 %v388, %v387
    %v441 = vpack.c.b16 %v390, %v389
    %v442 = vpack.c.b16 %v392, %v391
    %v443 = vpack.c.b16 %v394, %v393
    %vm493 = vcmask 130048
    %v495 = vsel %vm493, %v93, 0
    %497 = vmatprep.subr.bf16.mxu0 0
    %498 = vmatpush1.bf16.msra.mxu0 %v395
    %499 = vmatprep.subr.bf16.mxu0 0
    %500 = vmatpush1.bf16.msra.mxu0 %v396
    %501 = vmatprep.subr.bf16.mxu0 0
    %502 = vmatpush1.bf16.msra.mxu0 %v397
    %503 = vmatprep.subr.bf16.mxu0 0
    %504 = vmatpush1.bf16.msra.mxu0 %v398
    %505 = vmatprep.subr.bf16.mxu0 0
    %506 = vmatpush1.bf16.msra.mxu0 %v399
    %507 = vmatprep.subr.bf16.mxu0 0
    %508 = vmatpush1.bf16.msra.mxu0 %v400
    %509 = vmatprep.subr.bf16.mxu0 0
    %510 = vmatpush1.bf16.msra.mxu0 %v401
    %511 = vmatprep.subr.bf16.mxu0 0
    %512 = vmatpush1.bf16.msra.mxu0 %v402
    %513 = vmatprep.subr.bf16.mxu0 0
    %514 = vmatpush1.bf16.msra.mxu0 %v403
    %515 = vmatprep.subr.bf16.mxu0 0
    %516 = vmatpush1.bf16.msra.mxu0 %v404
    %517 = vmatprep.subr.bf16.mxu0 0
    %518 = vmatpush1.bf16.msra.mxu0 %v405
    %519 = vmatprep.subr.bf16.mxu0 0
    %520 = vmatpush1.bf16.msra.mxu0 %v406
    %521 = vmatprep.subr.bf16.mxu0 0
    %522 = vmatpush1.bf16.msra.mxu0 %v407
    %523 = vmatprep.subr.bf16.mxu0 0
    %524 = vmatpush1.bf16.msra.mxu0 %v408
    %525 = vmatprep.subr.bf16.mxu0 0
    %526 = vmatpush1.bf16.msra.mxu0 %v409
    %527 = vmatprep.subr.bf16.mxu0 0
    %528 = vmatpush1.bf16.msra.mxu0 %v410
    %529 = vmatprep.mubr.bf16.mxu0 %v88
    %530 = vmatmul.mubr.bf16.gmra.mrb[0].mxu0 %v87
    %v531 = vpop.f32.mrb[0].mxu0
    %v532 = vadd.f32 %v197, %v531
    %v533 = vpop.f32.mrb[0].mxu0
    %v534 = vpop.f32.mrb[0].mxu0
    %v535 = vpop.f32.mrb[0].mxu0
    %536 = vdwg.mxu0
    %537 = vmatprep.subr.bf16.mxu0 0
    %538 = vmatpush1.bf16.msra.mxu0 %v411
    %539 = vmatprep.subr.bf16.mxu0 0
    %540 = vmatpush1.bf16.msra.mxu0 %v412
    %541 = vmatprep.subr.bf16.mxu0 0
    %542 = vmatpush1.bf16.msra.mxu0 %v413
    %543 = vmatprep.subr.bf16.mxu0 0
    %544 = vmatpush1.bf16.msra.mxu0 %v414
    %545 = vmatprep.subr.bf16.mxu0 0
    %546 = vmatpush1.bf16.msra.mxu0 %v415
    %547 = vmatprep.subr.bf16.mxu0 0
    %548 = vmatpush1.bf16.msra.mxu0 %v416
    %549 = vmatprep.subr.bf16.mxu0 0
    %550 = vmatpush1.bf16.msra.mxu0 %v417
    %551 = vmatprep.subr.bf16.mxu0 0
    %552 = vmatpush1.bf16.msra.mxu0 %v418
    %553 = vmatprep.subr.bf16.mxu0 0
    %554 = vmatpush1.bf16.msra.mxu0 %v419
    %555 = vmatprep.subr.bf16.mxu0 0
    %556 = vmatpush1.bf16.msra.mxu0 %v420
    %557 = vmatprep.subr.bf16.mxu0 0
    %558 = vmatpush1.bf16.msra.mxu0 %v421
    %559 = vmatprep.subr.bf16.mxu0 0
    %560 = vmatpush1.bf16.msra.mxu0 %v422
    %561 = vmatprep.subr.bf16.mxu0 0
    %562 = vmatpush1.bf16.msra.mxu0 %v423
    %563 = vmatprep.subr.bf16.mxu0 0
    %564 = vmatpush1.bf16.msra.mxu0 %v424
    %565 = vmatprep.subr.bf16.mxu0 0
    %566 = vmatpush1.bf16.msra.mxu0 %v425
    %567 = vmatprep.subr.bf16.mxu0 0
    %568 = vmatpush1.bf16.msra.mxu0 %v426
    %569 = vmatprep.mubr.bf16.mxu0 %v90
    %570 = vmatmul.mubr.bf16.gmra.mrb[0].mxu0 %v89
    %v571 = vpop.f32.mrb[0].mxu0
    %v572 = vadd.f32 %v532, %v571
    %v573 = vpop.f32.mrb[0].mxu0
    %v574 = vpop.f32.mrb[0].mxu0
    %v575 = vpop.f32.mrb[0].mxu0
    %576 = vdwg.mxu0
    %577 = vmatprep.subr.bf16.mxu0 0
    %578 = vmatpush1.bf16.msra.mxu0 %v427
    %579 = vmatprep.subr.bf16.mxu0 0
    %580 = vmatpush1.bf16.msra.mxu0 %v428
    %581 = vmatprep.subr.bf16.mxu0 0
    %582 = vmatpush1.bf16.msra.mxu0 %v429
    %583 = vmatprep.subr.bf16.mxu0 0
    %584 = vmatpush1.bf16.msra.mxu0 %v430
    %585 = vmatprep.subr.bf16.mxu0 0
    %586 = vmatpush1.bf16.msra.mxu0 %v431
    %587 = vmatprep.subr.bf16.mxu0 0
    %588 = vmatpush1.bf16.msra.mxu0 %v432
    %589 = vmatprep.subr.bf16.mxu0 0
    %590 = vmatpush1.bf16.msra.mxu0 %v433
    %591 = vmatprep.subr.bf16.mxu0 0
    %592 = vmatpush1.bf16.msra.mxu0 %v434
    %593 = vmatprep.subr.bf16.mxu0 0
    %594 = vmatpush1.bf16.msra.mxu0 %v435
    %595 = vmatprep.subr.bf16.mxu0 0
    %596 = vmatpush1.bf16.msra.mxu0 %v436
    %597 = vmatprep.subr.bf16.mxu0 0
    %598 = vmatpush1.bf16.msra.mxu0 %v437
    %599 = vmatprep.subr.bf16.mxu0 0
    %600 = vmatpush1.bf16.msra.mxu0 %v438
    %601 = vmatprep.subr.bf16.mxu0 0
    %602 = vmatpush1.bf16.msra.mxu0 %v439
    %603 = vmatprep.subr.bf16.mxu0 0
    %604 = vmatpush1.bf16.msra.mxu0 %v440
    %605 = vmatprep.subr.bf16.mxu0 0
    %606 = vmatpush1.bf16.msra.mxu0 %v441
    %607 = vmatprep.subr.bf16.mxu0 0
    %608 = vmatpush1.bf16.msra.mxu0 %v442
    %609 = vmatprep.mubr.bf16.mxu0 %v92
    %610 = vmatmul.mubr.bf16.gmra.mrb[0].mxu0 %v91
    %v611 = vpop.f32.mrb[0].mxu0
    %v612 = vadd.f32 %v572, %v611
    %v613 = vpop.f32.mrb[0].mxu0
    %v614 = vpop.f32.mrb[0].mxu0
    %v615 = vpop.f32.mrb[0].mxu0
    %616 = vdwg.mxu0
    %617 = vmatprep.subr.bf16.mxu0 0
    %618 = vmatpush1.bf16.msra.mxu0 %v443
    %619 = vmatprep.subr.bf16.mxu0 0
    %620 = vmatpush1.bf16.msra.mxu0 0
    %621 = vmatprep.subr.bf16.mxu0 0
    %622 = vmatpush1.bf16.msra.mxu0 0
    %623 = vmatprep.subr.bf16.mxu0 0
    %624 = vmatpush1.bf16.msra.mxu0 0
    %625 = vmatprep.subr.bf16.mxu0 0
    %626 = vmatpush1.bf16.msra.mxu0 0
    %627 = vmatprep.subr.bf16.mxu0 0
    %628 = vmatpush1.bf16.msra.mxu0 0
    %629 = vmatprep.subr.bf16.mxu0 0
    %630 = vmatpush1.bf16.msra.mxu0 0
    %631 = vmatprep.subr.bf16.mxu0 0
    %632 = vmatpush1.bf16.msra.mxu0 0
    %633 = vmatprep.subr.bf16.mxu0 0
    %634 = vmatpush1.bf16.msra.mxu0 0
    %635 = vmatprep.subr.bf16.mxu0 0
    %636 = vmatpush1.bf16.msra.mxu0 0
    %637 = vmatprep.subr.bf16.mxu0 0
    %638 = vmatpush1.bf16.msra.mxu0 0
    %639 = vmatprep.subr.bf16.mxu0 0
    %640 = vmatpush1.bf16.msra.mxu0 0
    %641 = vmatprep.subr.bf16.mxu0 0
    %642 = vmatpush1.bf16.msra.mxu0 0
    %643 = vmatprep.subr.bf16.mxu0 0
    %644 = vmatpush1.bf16.msra.mxu0 0
    %645 = vmatprep.subr.bf16.mxu0 0
    %646 = vmatpush1.bf16.msra.mxu0 0
    %647 = vmatprep.subr.bf16.mxu0 0
    %648 = vmatpush1.bf16.msra.mxu0 0
    %649 = vmatprep.mubr.bf16.mxu0 0
    %650 = vmatmul.mubr.bf16.gmra.mrb[0].mxu0 %v495
    %v651 = vpop.f32.mrb[0].mxu0
    %v652 = vadd.f32 %v612, %v651
    %v653 = vpop.f32.mrb[0].mxu0
    %v654 = vpop.f32.mrb[0].mxu0
    %v655 = vpop.f32.mrb[0].mxu0
    %656 = vdwg.mxu0
    %v657 = vmul.f32 %v652, 0.5
    %v658 = vtanh.pop %v657
    %v659 = vmul.f32 %v658, 0.5
    %v660 = vadd.f32 %v659, 0.5
    %v661 = vpack.c.bf16 %v660, %v660
    %v662 = vld [vmem:[#allocation6] sm:$0xf]
    %v663 = vld [vmem:[#allocation6 + $0x4] sm:$0xf]
    %v664 = vld [vmem:[#allocation6 + $0x8] sm:$0xf]
    %v665 = vld [vmem:[#allocation6 + $0xc] sm:$0xf]
    %v666 = vld [vmem:[#allocation6 + $0x10] sm:$0xf]
    %v667 = vld [vmem:[#allocation6 + $0x14] sm:$0xf]
    %v668 = vld [vmem:[#allocation6 + $0x18] sm:$0xf]
    %v669 = vld [vmem:[#allocation6 + $0x1c] sm:$0xf]
    %v670 = vld [vmem:[#allocation6 + $0x20] sm:$0xf]
    %v671 = vld [vmem:[#allocation6 + $0x24] sm:$0xf]
    %v672 = vld [vmem:[#allocation6 + $0x28] sm:$0xf]
    %v673 = vld [vmem:[#allocation6 + $0x2c] sm:$0xf]
    %v674 = vld [vmem:[#allocation6 + $0x30] sm:$0xf]
    %v675 = vld [vmem:[#allocation6 + $0x34] sm:$0xf]
    %v676 = vld [vmem:[#allocation6 + $0x38] sm:$0xf]
    %v677 = vld [vmem:[#allocation6 + $0x3c] sm:$0xf]
    %v678 = vld [vmem:[%s4] sm:$0x1]
    %v680 = vlaneseq
    %v681 = vshrl.u32 %v680, 7
    %v682 = vsub.s32 0, %v681
    %v683 = vrot.slane %v678, %v682
    %v701 = vunpack.c.l.b16 %v662
    %v702 = vunpack.c.l.b16 %v663
    %v703 = vunpack.c.l.b16 %v664
    %v704 = vunpack.c.l.b16 %v665
    %v705 = vunpack.c.l.b16 %v666
    %v706 = vunpack.c.l.b16 %v667
    %v707 = vunpack.c.l.b16 %v668
    %v708 = vunpack.c.l.b16 %v669
    %v709 = vunpack.c.l.b16 %v670
    %v710 = vunpack.c.l.b16 %v671
    %v711 = vunpack.c.l.b16 %v672
    %v712 = vunpack.c.l.b16 %v673
    %v713 = vunpack.c.l.b16 %v674
    %v714 = vunpack.c.l.b16 %v675
    %v715 = vunpack.c.l.b16 %v676
    %v716 = vunpack.c.l.b16 %v677
    %v717 = vpack.c.b16 %v702, %v701
    %v718 = vpack.c.b16 %v704, %v703
    %v719 = vpack.c.b16 %v706, %v705
    %v720 = vpack.c.b16 %v708, %v707
    %v721 = vpack.c.b16 %v710, %v709
    %v722 = vpack.c.b16 %v712, %v711
    %v723 = vpack.c.b16 %v714, %v713
    %v724 = vpack.c.b16 %v716, %v715
    %733 = vmatprep.subr.bf16.mxu0 0
    %734 = vmatpush1.bf16.msra.mxu0 %v717
    %735 = vmatprep.subr.bf16.mxu0 0
    %736 = vmatpush1.bf16.msra.mxu0 %v718
    %737 = vmatprep.subr.bf16.mxu0 0
    %738 = vmatpush1.bf16.msra.mxu0 %v719
    %739 = vmatprep.subr.bf16.mxu0 0
    %740 = vmatpush1.bf16.msra.mxu0 %v720
    %741 = vmatprep.subr.bf16.mxu0 0
    %742 = vmatpush1.bf16.msra.mxu0 %v721
    %743 = vmatprep.subr.bf16.mxu0 0
    %744 = vmatpush1.bf16.msra.mxu0 %v722
    %745 = vmatprep.subr.bf16.mxu0 0
    %746 = vmatpush1.bf16.msra.mxu0 %v723
    %747 = vmatprep.subr.bf16.mxu0 0
    %748 = vmatpush1.bf16.msra.mxu0 %v724
    %749 = vmatprep.subr.bf16.mxu0 0
    %750 = vmatpush1.bf16.msra.mxu0 0
    %751 = vmatprep.subr.bf16.mxu0 0
    %752 = vmatpush1.bf16.msra.mxu0 0
    %753 = vmatprep.subr.bf16.mxu0 0
    %754 = vmatpush1.bf16.msra.mxu0 0
    %755 = vmatprep.subr.bf16.mxu0 0
    %756 = vmatpush1.bf16.msra.mxu0 0
    %757 = vmatprep.subr.bf16.mxu0 0
    %758 = vmatpush1.bf16.msra.mxu0 0
    %759 = vmatprep.subr.bf16.mxu0 0
    %760 = vmatpush1.bf16.msra.mxu0 0
    %761 = vmatprep.subr.bf16.mxu0 0
    %762 = vmatpush1.bf16.msra.mxu0 0
    %763 = vmatprep.subr.bf16.mxu0 0
    %764 = vmatpush1.bf16.msra.mxu0 0
    %765 = vmatprep.mubr.bf16.mxu0 0
    %766 = vmatmul.mubr.bf16.gmra.mrb[0].mxu0 %v661
    %v767 = vpop.f32.mrb[0].mxu0
    %v768 = vadd.f32 %v683, %v767
    %v769 = vpop.f32.mrb[0].mxu0
    %v770 = vpop.f32.mrb[0].mxu0
    %v771 = vpop.f32.mrb[0].mxu0
    %772 = vdwg.mxu0
    %v773 = vmul.f32 %v768, 0.5
    %v774 = vtanh.pop %v773
    %v775 = vmul.f32 %v774, 0.5
    %v776 = vadd.f32 %v775, 0.5
    %v777 = vpack.c.bf16 %v776, %v776
    %v778 = vld [vmem:[#allocation7] sm:$0xf]
    %v779 = vld [vmem:[#allocation7 + $0x4] sm:$0xf]
    %v780 = vld [vmem:[#allocation7 + $0x8] sm:$0xf]
    %v781 = vld [vmem:[#allocation7 + $0xc] sm:$0xf]
    %v782 = vld [vmem:[#allocation7 + $0x10] sm:$0xf]
    %v783 = vld [vmem:[#allocation7 + $0x14] sm:$0xf]
    %v784 = vld [vmem:[#allocation7 + $0x18] sm:$0xf]
    %v785 = vld [vmem:[#allocation7 + $0x1c] sm:$0xf]
    %v786 = vld [vmem:[#allocation7 + $0x20] sm:$0xf]
    %v787 = vld [vmem:[#allocation7 + $0x24] sm:$0xf]
    %v788 = vld [vmem:[#allocation7 + $0x28] sm:$0xf]
    %v789 = vld [vmem:[#allocation7 + $0x2c] sm:$0xf]
    %v790 = vld [vmem:[#allocation7 + $0x30] sm:$0xf]
    %v791 = vld [vmem:[#allocation7 + $0x34] sm:$0xf]
    %v792 = vld [vmem:[#allocation7 + $0x38] sm:$0xf]
    %v793 = vld [vmem:[#allocation7 + $0x3c] sm:$0xf]
    %v794 = vld [vmem:[%s6] sm:$0x1]
    %v796 = vlaneseq
    %v797 = vshrl.u32 %v796, 7
    %v798 = vsub.s32 0, %v797
    %v799 = vrot.slane %v794, %v798
    %v817 = vunpack.c.l.b16 %v778
    %v818 = vunpack.c.l.b16 %v779
    %v819 = vunpack.c.l.b16 %v780
    %v820 = vunpack.c.l.b16 %v781
    %v821 = vunpack.c.l.b16 %v782
    %v822 = vunpack.c.l.b16 %v783
    %v823 = vunpack.c.l.b16 %v784
    %v824 = vunpack.c.l.b16 %v785
    %v825 = vunpack.c.l.b16 %v786
    %v826 = vunpack.c.l.b16 %v787
    %v827 = vunpack.c.l.b16 %v788
    %v828 = vunpack.c.l.b16 %v789
    %v829 = vunpack.c.l.b16 %v790
    %v830 = vunpack.c.l.b16 %v791
    %v831 = vunpack.c.l.b16 %v792
    %v832 = vunpack.c.l.b16 %v793
    %v833 = vpack.c.b16 %v818, %v817
    %v834 = vpack.c.b16 %v820, %v819
    %v835 = vpack.c.b16 %v822, %v821
    %v836 = vpack.c.b16 %v824, %v823
    %v837 = vpack.c.b16 %v826, %v825
    %v838 = vpack.c.b16 %v828, %v827
    %v839 = vpack.c.b16 %v830, %v829
    %v840 = vpack.c.b16 %v832, %v831
    %849 = vmatprep.subr.bf16.mxu0 0
    %850 = vmatpush1.bf16.msra.mxu0 %v833
    %851 = vmatprep.subr.bf16.mxu0 0
    %852 = vmatpush1.bf16.msra.mxu0 %v834
    %853 = vmatprep.subr.bf16.mxu0 0
    %854 = vmatpush1.bf16.msra.mxu0 %v835
    %855 = vmatprep.subr.bf16.mxu0 0
    %856 = vmatpush1.bf16.msra.mxu0 %v836
    %857 = vmatprep.subr.bf16.mxu0 0
    %858 = vmatpush1.bf16.msra.mxu0 %v837
    %859 = vmatprep.subr.bf16.mxu0 0
    %860 = vmatpush1.bf16.msra.mxu0 %v838
    %861 = vmatprep.subr.bf16.mxu0 0
    %862 = vmatpush1.bf16.msra.mxu0 %v839
    %863 = vmatprep.subr.bf16.mxu0 0
    %864 = vmatpush1.bf16.msra.mxu0 %v840
    %865 = vmatprep.subr.bf16.mxu0 0
    %866 = vmatpush1.bf16.msra.mxu0 0
    %867 = vmatprep.subr.bf16.mxu0 0
    %868 = vmatpush1.bf16.msra.mxu0 0
    %869 = vmatprep.subr.bf16.mxu0 0
    %870 = vmatpush1.bf16.msra.mxu0 0
    %871 = vmatprep.subr.bf16.mxu0 0
    %872 = vmatpush1.bf16.msra.mxu0 0
    %873 = vmatprep.subr.bf16.mxu0 0
    %874 = vmatpush1.bf16.msra.mxu0 0
    %875 = vmatprep.subr.bf16.mxu0 0
    %876 = vmatpush1.bf16.msra.mxu0 0
    %877 = vmatprep.subr.bf16.mxu0 0
    %878 = vmatpush1.bf16.msra.mxu0 0
    %879 = vmatprep.subr.bf16.mxu0 0
    %880 = vmatpush1.bf16.msra.mxu0 0
    %881 = vmatprep.mubr.bf16.mxu0 0
    %882 = vmatmul.mubr.bf16.gmra.mrb[0].mxu0 %v777
    %v883 = vpop.f32.mrb[0].mxu0
    %v884 = vadd.f32 %v799, %v883
    %v885 = vpop.f32.mrb[0].mxu0
    %v886 = vpop.f32.mrb[0].mxu0
    %v887 = vpop.f32.mrb[0].mxu0
    %888 = vdwg.mxu0
    %889 = vmax.xlane.f32.xlu0 %v884
    %v890 = vpop.xlane.xlu0 %889
    %v891 = vsub.f32 %v884, %v890
    %v892 = vmul.f32 %v891, 1.442695
    %v893 = vpow.pop %v892
    %894 = vadd.xlane.f32.xlu0 %v893
    %v895 = vpop.xlane.xlu0 %894
    %v896 = vrcp.pop %v895
    %v897 = vmul.f32 %v893, %v896
    %v898 = vpack.c.bf16 %v897, %v897
    %899 = vst [vmem:[%s7] sm:$0xf] %v898
    // Predicated region
    $region46: #{network_forward.1} parent=1 // pred_check
      _
    $region47: #{network_forward.1} parent=1 // pred_check_branch
      %901 = sbr.rel (0) target = $region49
    $region48: #{network_forward.1} parent=1 // pred_region
      _
    $region49: #{network_forward.1} parent=1 // pred_fallthru
      _
    // Predicated region
    $region50: #{network_forward.1} parent=1 // pred_check
      _
    $region51: #{network_forward.1} parent=1 // pred_check_branch
      %903 = sbr.rel (0) target = $region53
    $region52: #{network_forward.1} parent=1 // pred_region
      _
    $region53: #{network_forward.1} parent=1 // pred_fallthru
      _
    %904 = vsyncpa [#allocation3], 1
    %905 = vsyncpa [#allocation5], 1
    %906 = vsyncpa [#allocation8], 1

</llo_original>
